<compile_context>
chip_gen: v6e
topology: v6e:2x2x1
jax: 0.10.0
libtpu: 0.0.40
codegen_flags: <defaults>
</compile_context>

<pallas_src>
import functools

import jax
import jax.numpy as jnp
from jax.experimental import pallas as pl
from jax.experimental.pallas import tpu as pltpu


def _round_up(x: int, m: int) -> int:
    return ((x + m - 1) // m) * m


def _patch_embed_kernel(x_ref, w_ref, o_ref):
    # x_ref: (tile_l, K) tile of flattened patches in its HBM dtype (f32/bf16)
    # w_ref: (K, E)     projection matrix, resident in VMEM across the grid
    # o_ref: (tile_l, E) output tile
    # Cast to the weight/compute dtype on the VPU (free next to MXU/DMA),
    # accumulate in f32 on the MXU, cast once on store.
    a = x_ref[...].astype(w_ref.dtype)
    o_ref[...] = jnp.dot(
        a, w_ref[...], preferred_element_type=jnp.float32
    ).astype(o_ref.dtype)


def pack_patch_embed_weight(weight, compute_dtype=jnp.bfloat16):
    """One-time prep of the Conv3d weight into a (K, embed_dim) matrix.

    weight: (embed_dim, in_chans, t, p, p).  Do this once per model / update,
    not per forward call (it is a full HBM pass over the weight).
    """
    embed_dim = weight.shape[0]
    return jnp.asarray(weight).reshape(embed_dim, -1).T.astype(compute_dtype)


def _choose_tile_l(L: int, tile_l: int) -> int:
    # Multiples of 256 (256-wide MXU on v6e/v7x, >=8 sublanes everywhere),
    # capped so cdiv(L, tile) >= 4 when L allows it (keeps both v7x
    # TensorCores busy on the "parallel" grid axis).
    tile_l = max(256, (tile_l // 256) * 256)
    cap = max(256, _round_up(pl.cdiv(L, 4), 256))
    return min(tile_l, cap)


def qwen2_vision_patch_embed(x, weight, *, tile_l=512,
                             out_dtype=jnp.bfloat16,
                             compute_dtype=jnp.bfloat16):
    """Forward pass of Qwen2VisionPatchEmbed.

    x:      (L, K) with K = in_chans * temporal_patch_size * patch_size**2.
            NOTE: the flattening order of x's last dim must be
            (in_chans, temporal_patch, patch, patch) -- the same order
            weight.reshape(embed_dim, -1) uses -- exactly as the PyTorch
            module's x.view(...) implies.
    weight: either the raw Conv3d weight (embed_dim, in_chans, t, p, p) or a
            pre-packed (K, embed_dim) matrix from pack_patch_embed_weight().
            Pre-pack once for repeated calls.
    out_dtype: bf16 by default (halves writeback; the v6e/v7x gate).  Pass
            out_dtype=x.dtype to reproduce the PyTorch f32 output dtype.
    Returns (L, embed_dim) in out_dtype.
    """
    L, K = x.shape
    if weight.ndim != 2:
        weight = pack_patch_embed_weight(weight, compute_dtype)
    assert weight.shape[0] == K, (
        f"x last dim {K} does not match flattened conv weight {weight.shape}")
    embed_dim = weight.shape[1]
    out_dtype = jnp.dtype(out_dtype if out_dtype is not None else x.dtype)

    tl = _choose_tile_l(L, tile_l)
    grid = (pl.cdiv(L, tl),)

    # VMEM footprint (double-buffered x/out tiles + resident weight) is
    # ~13 MB at tl=512 with the real 1176x1152 weight -- well inside the
    # default scoped VMEM on v5e/v6e/v7x, so no vmem_limit override needed.
    cost = pl.CostEstimate(
        flops=2 * L * K * embed_dim,
        transcendentals=0,
        bytes_accessed=(L * K * x.dtype.itemsize
                        + K * embed_dim * weight.dtype.itemsize
                        + L * embed_dim * out_dtype.itemsize),
    )

    return pl.pallas_call(
        _patch_embed_kernel,
        out_shape=jax.ShapeDtypeStruct((L, embed_dim), out_dtype),
        grid=grid,
        in_specs=[
            # x streamed in L tiles; last (partial) block is handled by Pallas,
            # garbage rows are safe because rows are independent (no reduction
            # over L) and their output rows are masked on writeback.
            pl.BlockSpec((tl, K), lambda i: (i, 0)),
            # Constant index_map: the (K, E) weight is DMA'd once and stays
            # resident in VMEM for the whole grid.
            # TODO(synk): on v7x with much larger tiles, pipeline_mode=
            # pl.Buffered(1) here would reclaim the unused second weight
            # buffer; at these sizes VMEM is nowhere near the limit.
            pl.BlockSpec((K, embed_dim), lambda i: (0, 0)),
        ],
        out_specs=pl.BlockSpec((tl, embed_dim), lambda i: (i, 0)),
        compiler_params=pltpu.CompilerParams(
            dimension_semantics=("parallel",),
        ),
        cost_estimate=cost,
    )(x, weight)


if __name__ == "__main__":
    # Small shapes consistent with the module (real defaults are 14/2/3/1152).
    patch_size = 4
    temporal_patch_size = 2
    in_chans = 3
    embed_dim = 128
    L = 200  # deliberately NOT a multiple of the tile: exercises partial block
    K = in_chans * temporal_patch_size * patch_size * patch_size  # = 96

    key = jax.random.PRNGKey(0)
    kx, kw = jax.random.split(key)
    x = jax.random.normal(kx, (L, K), dtype=jnp.float32)
    # Conv3d weight: (out_ch, in_ch, kT, kH, kW), no bias.
    weight = jax.random.normal(
        kw, (embed_dim, in_chans, temporal_patch_size, patch_size, patch_size),
        dtype=jnp.float32,
    ) * 0.02

    # One-time weight packing, hoisted out of the per-call path.
    w_packed = pack_patch_embed_weight(weight)  # (K, E) bf16

    fwd = jax.jit(functools.partial(qwen2_vision_patch_embed, tile_l=512))
    out = jax.block_until_ready(fwd(x, w_packed))

    assert out.shape == (L, embed_dim)
    assert out.dtype == jnp.bfloat16

    w_flat_f32 = weight.reshape(embed_dim, K).T  # (K, E) f32

    # Reference 1: the same numeric recipe (bf16 operands, f32 accumulation).
    ref_recipe = jnp.dot(
        x.astype(jnp.bfloat16), w_flat_f32.astype(jnp.bfloat16),
        preferred_element_type=jnp.float32,
    ).astype(jnp.bfloat16)
    err = float(jnp.max(jnp.abs(out.astype(jnp.float32)
                                - ref_recipe.astype(jnp.float32))))
    assert err < 2e-2, f"vs bf16-recipe reference: max abs err {err}"

    # Reference 2: the true f32 result of the PyTorch Conv3d-equivalent.
    # Documents the intentional bf16-compute deviation from the f32 module.
    ref_f32 = jnp.dot(x, w_flat_f32)
    err32 = float(jnp.max(jnp.abs(out.astype(jnp.float32) - ref_f32)))
    assert err32 < 5e-2, f"vs f32 reference: max abs err {err32}"

    print("KERNEL_OK")
</pallas_src>

<mosaic_0001>
module attributes {stable_mosaic.version = 11 : i64} {
  func.func @_patch_embed_kernel(%arg0: i32, %arg1: memref<256x96xf32, #tpu.memory_space<vmem>>, %arg2: memref<96x128xbf16, #tpu.memory_space<vmem>>, %arg3: memref<256x128xbf16, #tpu.memory_space<vmem>>) attributes {dimension_semantics = [#tpu.dimension_semantics<parallel>], iteration_bounds = array<i64: 1>, scalar_prefetch = 0 : i64, scratch_operands = 0 : i64, tpu.core_type = #tpu.core_type<tc>, window_params = [{transform_indices = @transform_0, window_bounds = array<i64: 256, 96>}, {pipeline_mode = #tpu.pipeline_mode<synchronous>, transform_indices = @transform_1, window_bounds = array<i64: 96, 128>}, {transform_indices = @transform_2, window_bounds = array<i64: 256, 128>}]} {
    %c0 = arith.constant 0 : index
    %c0_0 = arith.constant 0 : index
    %0 = vector.load %arg1[%c0, %c0_0] : memref<256x96xf32, #tpu.memory_space<vmem>>, vector<256x96xf32>
    %1 = arith.truncf %0 : vector<256x96xf32> to vector<256x96xbf16>
    %c0_1 = arith.constant 0 : index
    %c0_2 = arith.constant 0 : index
    %2 = vector.load %arg2[%c0_1, %c0_2] : memref<96x128xbf16, #tpu.memory_space<vmem>>, vector<96x128xbf16>
    %cst = arith.constant dense<0.000000e+00> : vector<256x128xf32>
    %3 = tpu.matmul %1, %2, %cst {dimension_numbers = #tpu.dot_dimension_numbers<[1], [0], [0], [1], [0, 0, 1, 1], [], []>} : vector<256x96xbf16>, vector<96x128xbf16>, vector<256x128xf32> -> vector<256x128xf32>
    %4 = arith.truncf %3 : vector<256x128xf32> to vector<256x128xbf16>
    %c0_3 = arith.constant 0 : index
    %c0_4 = arith.constant 0 : index
    %5 = vector.load %arg3[%c0_3, %c0_4] : memref<256x128xbf16, #tpu.memory_space<vmem>>, vector<256x128xbf16>
    tpu.vector_store %arg3[%c0_3, %c0_4], %4 {strides = array<i32>} : memref<256x128xbf16, #tpu.memory_space<vmem>>, vector<256x128xbf16>,
    return
  }
  func.func @transform_0(%arg0: i32) -> (i32, i32) {
    %c0_i32 = arith.constant 0 : i32
    %c0_i32_0 = arith.constant 0 : i32
    return %arg0, %c0_i32 : i32, i32
  }
  func.func @transform_1(%arg0: i32) -> (i32, i32) {
    %c0_i32 = arith.constant 0 : i32
    %c0_i32_0 = arith.constant 0 : i32
    %c0_i32_1 = arith.constant 0 : i32
    return %c0_i32, %c0_i32_0 : i32, i32
  }
  func.func @transform_2(%arg0: i32) -> (i32, i32) {
    %c0_i32 = arith.constant 0 : i32
    %c0_i32_0 = arith.constant 0 : i32
    return %arg0, %c0_i32 : i32, i32
  }
}

</mosaic_0001>

<llo_original>
// kernel: qwen2_vision_patch_embed.1
$region0: #{qwen2_vision_patch_embed.1}
  #allocation0 [shape = 'u32[]', space=smem, size = 0x4, offset = 0x4, fixed_abs, tag = 'smem constant byte address 0x4 - core index']
  #allocation1 [shape = 'u32[144,128]{1,0:T(1,128)}', space=vmem, size = 0x12000, scoped, tag = 'internal scratch']
  %s0 = inlined_call_operand.vmem [shape: f32[200,96], index: 0, kind: input, shape index: {}]
  %s1 = inlined_call_operand.vmem [shape: bf16[96,128], index: 1, kind: input, shape index: {}]
  %s2 = inlined_call_operand.hbm [shape: bf16[200,128], index: 2, kind: output, shape index: {}]
  %s3 = sld [smem:[#allocation0]]
  $region18: #{qwen2_vision_patch_embed.1} parent=0
    _
  %s5 = ssub.s32 1, %s3
  %s6 = scalar_select 0, %s5, %s3
  $region1: #{qwen2_vision_patch_embed.1} parent=0
    #allocation2 [shape = 'u8[65536]{0}', space=vmem, size = 0x10000, scoped, tag = 'output window, operand 0, single buffered']
    #allocation3 [shape = 's32[1]{0}', space=sflag, size = 0x4, scoped, tag = 'scoped memory for qwen2_vision_patch_embed.1']
    %7 = vsyncpa [#allocation3], 0
    // Predicated region
    $region2: #{qwen2_vision_patch_embed.1} parent=1 // pred_check
      _
    $region3: #{qwen2_vision_patch_embed.1} parent=1 // pred_check_branch
      %9 = sbr.rel (0) target = $region5
    $region4: #{qwen2_vision_patch_embed.1} parent=1 // pred_region
      _
    $region5: #{qwen2_vision_patch_embed.1} parent=1 // pred_fallthru
      _
    // Predicated region
    $region6: #{qwen2_vision_patch_embed.1} parent=1 // pred_check
      _
    $region7: #{qwen2_vision_patch_embed.1} parent=1 // pred_check_branch
      %11 = sbr.rel (0) target = $region9
    $region8: #{qwen2_vision_patch_embed.1} parent=1 // pred_region
      _
    $region9: #{qwen2_vision_patch_embed.1} parent=1 // pred_fallthru
      _
    %v13 = vld [vmem:[%s0] sm:$0xff]
    %v14 = vld [vmem:[%s0 + $0x8] sm:$0xff]
    %v15 = vld [vmem:[%s0 + $0x10] sm:$0xff]
    %v16 = vld [vmem:[%s0 + $0x18] sm:$0xff]
    %v17 = vld [vmem:[%s0 + $0x20] sm:$0xff]
    %v18 = vld [vmem:[%s0 + $0x28] sm:$0xff]
    %v19 = vld [vmem:[%s0 + $0x30] sm:$0xff]
    %v20 = vld [vmem:[%s0 + $0x38] sm:$0xff]
    %v21 = vld [vmem:[%s0 + $0x40] sm:$0xff]
    %v22 = vld [vmem:[%s0 + $0x48] sm:$0xff]
    %v23 = vld [vmem:[%s0 + $0x50] sm:$0xff]
    %v24 = vld [vmem:[%s0 + $0x58] sm:$0xff]
    %v25 = vld [vmem:[%s0 + $0x60] sm:$0xff]
    %v26 = vld [vmem:[%s0 + $0x68] sm:$0xff]
    %v27 = vld [vmem:[%s0 + $0x70] sm:$0xff]
    %v28 = vld [vmem:[%s0 + $0x78] sm:$0xff]
    %v29 = vld [vmem:[%s0 + $0x80] sm:$0xff]
    %v30 = vld [vmem:[%s0 + $0x88] sm:$0xff]
    %v31 = vld [vmem:[%s0 + $0x90] sm:$0xff]
    %v32 = vld [vmem:[%s0 + $0x98] sm:$0xff]
    %v33 = vld [vmem:[%s0 + $0xa0] sm:$0xff]
    %v34 = vld [vmem:[%s0 + $0xa8] sm:$0xff]
    %v35 = vld [vmem:[%s0 + $0xb0] sm:$0xff]
    %v36 = vld [vmem:[%s0 + $0xb8] sm:$0xff]
    %v37 = vld [vmem:[%s0 + $0xc0] sm:$0xff]
    %v38 = vld [vmem:[%s0 + $0xc8] sm:$0xff]
    %v39 = vld [vmem:[%s0 + $0xd0] sm:$0xff]
    %v40 = vld [vmem:[%s0 + $0xd8] sm:$0xff]
    %v41 = vld [vmem:[%s0 + $0xe0] sm:$0xff]
    %v42 = vld [vmem:[%s0 + $0xe8] sm:$0xff]
    %v43 = vld [vmem:[%s0 + $0xf0] sm:$0xff]
    %v44 = vld [vmem:[%s0 + $0xf8] sm:$0xff]
    %v45 = vpack.c.bf16 %v14, %v13
    %v46 = vpack.c.bf16 %v16, %v15
    %v47 = vpack.c.bf16 %v18, %v17
    %v48 = vpack.c.bf16 %v20, %v19
    %v49 = vpack.c.bf16 %v22, %v21
    %v50 = vpack.c.bf16 %v24, %v23
    %v51 = vpack.c.bf16 %v26, %v25
    %v52 = vpack.c.bf16 %v28, %v27
    %v53 = vpack.c.bf16 %v30, %v29
    %v54 = vpack.c.bf16 %v32, %v31
    %v55 = vpack.c.bf16 %v34, %v33
    %v56 = vpack.c.bf16 %v36, %v35
    %v57 = vpack.c.bf16 %v38, %v37
    %v58 = vpack.c.bf16 %v40, %v39
    %v59 = vpack.c.bf16 %v42, %v41
    %v60 = vpack.c.bf16 %v44, %v43
    %v61 = vld [vmem:[%s1] sm:$0xf]
    %v62 = vld [vmem:[%s1 + $0x4] sm:$0xf]
    %v63 = vld [vmem:[%s1 + $0x8] sm:$0xf]
    %v64 = vld [vmem:[%s1 + $0xc] sm:$0xf]
    %v65 = vld [vmem:[%s1 + $0x10] sm:$0xf]
    %v66 = vld [vmem:[%s1 + $0x14] sm:$0xf]
    %v67 = vld [vmem:[%s1 + $0x18] sm:$0xf]
    %v68 = vld [vmem:[%s1 + $0x1c] sm:$0xf]
    %v69 = vld [vmem:[%s1 + $0x20] sm:$0xf]
    %v70 = vld [vmem:[%s1 + $0x24] sm:$0xf]
    %v71 = vld [vmem:[%s1 + $0x28] sm:$0xf]
    %v72 = vld [vmem:[%s1 + $0x2c] sm:$0xf]
    %v85 = vunpack.c.l.b16 %v61
    %v86 = vunpack.c.l.b16 %v62
    %v87 = vunpack.c.l.b16 %v63
    %v88 = vunpack.c.l.b16 %v64
    %v89 = vunpack.c.l.b16 %v65
    %v90 = vunpack.c.l.b16 %v66
    %v91 = vunpack.c.l.b16 %v67
    %v92 = vunpack.c.l.b16 %v68
    %v93 = vunpack.c.l.b16 %v69
    %v94 = vunpack.c.l.b16 %v70
    %v95 = vunpack.c.l.b16 %v71
    %v96 = vunpack.c.l.b16 %v72
    %v97 = vpack.c.b16 %v86, %v85
    %v98 = vpack.c.b16 %v88, %v87
    %v99 = vpack.c.b16 %v90, %v89
    %v100 = vpack.c.b16 %v92, %v91
    %v101 = vpack.c.b16 %v94, %v93
    %v102 = vpack.c.b16 %v96, %v95
    %vm109 = vcmask 785408
    %v111 = vsel %vm109, %v45, 0
    %v114 = vsel %vm109, %v46, 0
    %v117 = vsel %vm109, %v47, 0
    %v120 = vsel %vm109, %v48, 0
    %v123 = vsel %vm109, %v49, 0
    %v126 = vsel %vm109, %v50, 0
    %v129 = vsel %vm109, %v51, 0
    %v132 = vsel %vm109, %v52, 0
    %v135 = vsel %vm109, %v53, 0
    %v138 = vsel %vm109, %v54, 0
    %v141 = vsel %vm109, %v55, 0
    %v144 = vsel %vm109, %v56, 0
    %v147 = vsel %vm109, %v57, 0
    %v150 = vsel %vm109, %v58, 0
    %v153 = vsel %vm109, %v59, 0
    %v156 = vsel %vm109, %v60, 0
    %158 = vmatprep.subr.bf16.mxu0 0
    %159 = vmatpush1.bf16.msra.mxu0 0
    %160 = vmatprep.subr.bf16.mxu0 0
    %161 = vmatpush1.bf16.msra.mxu0 0
    %162 = vmatprep.subr.bf16.mxu0 0
    %163 = vmatpush1.bf16.msra.mxu0 %v102
    %164 = vmatprep.subr.bf16.mxu0 0
    %165 = vmatpush1.bf16.msra.mxu0 %v101
    %166 = vmatprep.subr.bf16.mxu0 0
    %167 = vmatpush1.bf16.msra.mxu0 %v100
    %168 = vmatprep.subr.bf16.mxu0 0
    %169 = vmatpush1.bf16.msra.mxu0 %v99
    %170 = vmatprep.subr.bf16.mxu0 0
    %171 = vmatpush1.bf16.msra.mxu0 %v98
    %172 = vmatprep.subr.bf16.mxu0 0
    %173 = vmatpush1.bf16.msra.mxu0 %v97
    %174 = vmatprep.subr.bf16.mxu0 0
    %175 = vmatpush2.bf16.msra.mxu0 0
    %176 = vmatprep.subr.bf16.mxu0 0
    %177 = vmatpush2.bf16.msra.mxu0 0
    %178 = vmatprep.subr.bf16.mxu0 0
    %179 = vmatpush2.bf16.msra.mxu0 0
    %180 = vmatprep.subr.bf16.mxu0 0
    %181 = vmatpush2.bf16.msra.mxu0 0
    %182 = vmatprep.subr.bf16.mxu0 0
    %183 = vmatpush2.bf16.msra.mxu0 0
    %184 = vmatprep.subr.bf16.mxu0 0
    %185 = vmatpush2.bf16.msra.mxu0 0
    %186 = vmatprep.subr.bf16.mxu0 0
    %187 = vmatpush2.bf16.msra.mxu0 0
    %188 = vmatprep.subr.bf16.mxu0 0
    %189 = vmatpush2.bf16.msra.mxu0 0
    %190 = vmatprep.mubr.bf16.mxu0 0
    %191 = vmatmul.mubr.bf16.gmra.mxu0 %v111
    %v192 = vpop.f32.mrf.mxu0
    %v193 = vadd.f32 0.0, %v192
    %v194 = vpop.f32.mrf.mxu0
    %v195 = vpop.f32.mrf.mxu0
    %v196 = vadd.f32 0.0, %v195
    %v197 = vpop.f32.mrf.mxu0
    %198 = vmatprep.mubr.bf16.mxu0 0
    %199 = vmatmul.mubr.bf16.gmra.mxu0 %v114
    %v200 = vpop.f32.mrf.mxu0
    %v201 = vadd.f32 0.0, %v200
    %v202 = vpop.f32.mrf.mxu0
    %v203 = vpop.f32.mrf.mxu0
    %v204 = vadd.f32 0.0, %v203
    %v205 = vpop.f32.mrf.mxu0
    %206 = vmatprep.mubr.bf16.mxu0 0
    %207 = vmatmul.mubr.bf16.gmra.mxu0 %v117
    %v208 = vpop.f32.mrf.mxu0
    %v209 = vadd.f32 0.0, %v208
    %v210 = vpop.f32.mrf.mxu0
    %v211 = vpop.f32.mrf.mxu0
    %v212 = vadd.f32 0.0, %v211
    %v213 = vpop.f32.mrf.mxu0
    %214 = vmatprep.mubr.bf16.mxu0 0
    %215 = vmatmul.mubr.bf16.gmra.mxu0 %v120
    %v216 = vpop.f32.mrf.mxu0
    %v217 = vadd.f32 0.0, %v216
    %v218 = vpop.f32.mrf.mxu0
    %v219 = vpop.f32.mrf.mxu0
    %v220 = vadd.f32 0.0, %v219
    %v221 = vpop.f32.mrf.mxu0
    %222 = vmatprep.mubr.bf16.mxu0 0
    %223 = vmatmul.mubr.bf16.gmra.mxu0 %v123
    %v224 = vpop.f32.mrf.mxu0
    %v225 = vadd.f32 0.0, %v224
    %v226 = vpop.f32.mrf.mxu0
    %v227 = vpop.f32.mrf.mxu0
    %v228 = vadd.f32 0.0, %v227
    %v229 = vpop.f32.mrf.mxu0
    %230 = vmatprep.mubr.bf16.mxu0 0
    %231 = vmatmul.mubr.bf16.gmra.mxu0 %v126
    %v232 = vpop.f32.mrf.mxu0
    %v233 = vadd.f32 0.0, %v232
    %v234 = vpop.f32.mrf.mxu0
    %v235 = vpop.f32.mrf.mxu0
    %v236 = vadd.f32 0.0, %v235
    %v237 = vpop.f32.mrf.mxu0
    %238 = vmatprep.mubr.bf16.mxu0 0
    %239 = vmatmul.mubr.bf16.gmra.mxu0 %v129
    %v240 = vpop.f32.mrf.mxu0
    %v241 = vadd.f32 0.0, %v240
    %v242 = vpop.f32.mrf.mxu0
    %v243 = vpop.f32.mrf.mxu0
    %v244 = vadd.f32 0.0, %v243
    %v245 = vpop.f32.mrf.mxu0
    %246 = vmatprep.mubr.bf16.mxu0 0
    %247 = vmatmul.mubr.bf16.gmra.mxu0 %v132
    %v248 = vpop.f32.mrf.mxu0
    %v249 = vadd.f32 0.0, %v248
    %v250 = vpop.f32.mrf.mxu0
    %v251 = vpop.f32.mrf.mxu0
    %v252 = vadd.f32 0.0, %v251
    %v253 = vpop.f32.mrf.mxu0
    %254 = vmatprep.mubr.bf16.mxu0 0
    %255 = vmatmul.mubr.bf16.gmra.mxu0 %v135
    %v256 = vpop.f32.mrf.mxu0
    %v257 = vadd.f32 0.0, %v256
    %v258 = vpop.f32.mrf.mxu0
    %v259 = vpop.f32.mrf.mxu0
    %v260 = vadd.f32 0.0, %v259
    %v261 = vpop.f32.mrf.mxu0
    %262 = vmatprep.mubr.bf16.mxu0 0
    %263 = vmatmul.mubr.bf16.gmra.mxu0 %v138
    %v264 = vpop.f32.mrf.mxu0
    %v265 = vadd.f32 0.0, %v264
    %v266 = vpop.f32.mrf.mxu0
    %v267 = vpop.f32.mrf.mxu0
    %v268 = vadd.f32 0.0, %v267
    %v269 = vpop.f32.mrf.mxu0
    %270 = vmatprep.mubr.bf16.mxu0 0
    %271 = vmatmul.mubr.bf16.gmra.mxu0 %v141
    %v272 = vpop.f32.mrf.mxu0
    %v273 = vadd.f32 0.0, %v272
    %v274 = vpop.f32.mrf.mxu0
    %v275 = vpop.f32.mrf.mxu0
    %v276 = vadd.f32 0.0, %v275
    %v277 = vpop.f32.mrf.mxu0
    %278 = vmatprep.mubr.bf16.mxu0 0
    %279 = vmatmul.mubr.bf16.gmra.mxu0 %v144
    %v280 = vpop.f32.mrf.mxu0
    %v281 = vadd.f32 0.0, %v280
    %v282 = vpop.f32.mrf.mxu0
    %v283 = vpop.f32.mrf.mxu0
    %v284 = vadd.f32 0.0, %v283
    %v285 = vpop.f32.mrf.mxu0
    %286 = vmatprep.mubr.bf16.mxu0 0
    %287 = vmatmul.mubr.bf16.gmra.mxu0 %v147
    %v288 = vpop.f32.mrf.mxu0
    %v289 = vadd.f32 0.0, %v288
    %v290 = vpop.f32.mrf.mxu0
    %v291 = vpop.f32.mrf.mxu0
    %v292 = vadd.f32 0.0, %v291
    %v293 = vpop.f32.mrf.mxu0
    %294 = vmatprep.mubr.bf16.mxu0 0
    %295 = vmatmul.mubr.bf16.gmra.mxu0 %v150
    %v296 = vpop.f32.mrf.mxu0
    %v297 = vadd.f32 0.0, %v296
    %v298 = vpop.f32.mrf.mxu0
    %v299 = vpop.f32.mrf.mxu0
    %v300 = vadd.f32 0.0, %v299
    %v301 = vpop.f32.mrf.mxu0
    %302 = vmatprep.mubr.bf16.mxu0 0
    %303 = vmatmul.mubr.bf16.gmra.mxu0 %v153
    %v304 = vpop.f32.mrf.mxu0
    %v305 = vadd.f32 0.0, %v304
    %v306 = vpop.f32.mrf.mxu0
    %v307 = vpop.f32.mrf.mxu0
    %v308 = vadd.f32 0.0, %v307
    %v309 = vpop.f32.mrf.mxu0
    %310 = vmatprep.mubr.bf16.mxu0 0
    %311 = vmatmul.mubr.bf16.gmra.mxu0 %v156
    %v312 = vpop.f32.mrf.mxu0
    %v313 = vadd.f32 0.0, %v312
    %v314 = vpop.f32.mrf.mxu0
    %v315 = vpop.f32.mrf.mxu0
    %v316 = vadd.f32 0.0, %v315
    %v317 = vpop.f32.mrf.mxu0
    %318 = vdwg.mxu0
    %v319 = vpack.c.bf16 %v196, %v193
    %v320 = vpack.c.bf16 %v204, %v201
    %v321 = vpack.c.bf16 %v212, %v209
    %v322 = vpack.c.bf16 %v220, %v217
    %v323 = vpack.c.bf16 %v228, %v225
    %v324 = vpack.c.bf16 %v236, %v233
    %v325 = vpack.c.bf16 %v244, %v241
    %v326 = vpack.c.bf16 %v252, %v249
    %v327 = vpack.c.bf16 %v260, %v257
    %v328 = vpack.c.bf16 %v268, %v265
    %v329 = vpack.c.bf16 %v276, %v273
    %v330 = vpack.c.bf16 %v284, %v281
    %v331 = vpack.c.bf16 %v292, %v289
    %v332 = vpack.c.bf16 %v300, %v297
    %v333 = vpack.c.bf16 %v308, %v305
    %v334 = vpack.c.bf16 %v316, %v313
    %v351 = vunpack.c.l.b16 %v319
    %v352 = vunpack.c.h.b16 %v319
    %v353 = vunpack.c.l.b16 %v320
    %v354 = vunpack.c.h.b16 %v320
    %v355 = vunpack.c.l.b16 %v321
    %v356 = vunpack.c.h.b16 %v321
    %v357 = vunpack.c.l.b16 %v322
    %v358 = vunpack.c.h.b16 %v322
    %v359 = vunpack.c.l.b16 %v323
    %v360 = vunpack.c.h.b16 %v323
    %v361 = vunpack.c.l.b16 %v324
    %v362 = vunpack.c.h.b16 %v324
    %v363 = vunpack.c.l.b16 %v325
    %v364 = vunpack.c.h.b16 %v325
    %v365 = vunpack.c.l.b16 %v326
    %v366 = vunpack.c.h.b16 %v326
    %v367 = vunpack.c.l.b16 %v327
    %v368 = vunpack.c.h.b16 %v327
    %v369 = vunpack.c.l.b16 %v328
    %v370 = vunpack.c.h.b16 %v328
    %v371 = vunpack.c.l.b16 %v329
    %v372 = vunpack.c.h.b16 %v329
    %v373 = vunpack.c.l.b16 %v330
    %v374 = vunpack.c.h.b16 %v330
    %v375 = vunpack.c.l.b16 %v331
    %v376 = vunpack.c.h.b16 %v331
    %v377 = vunpack.c.l.b16 %v332
    %v378 = vunpack.c.h.b16 %v332
    %v379 = vunpack.c.l.b16 %v333
    %v380 = vunpack.c.h.b16 %v333
    %v381 = vunpack.c.l.b16 %v334
    %v382 = vunpack.c.h.b16 %v334
    %v383 = vpack.c.b16 %v351, %v351
    %v384 = vpack.c.b16 %v352, %v352
    %v385 = vpack.c.b16 %v353, %v353
    %v386 = vpack.c.b16 %v354, %v354
    %v387 = vpack.c.b16 %v355, %v355
    %v388 = vpack.c.b16 %v356, %v356
    %v389 = vpack.c.b16 %v357, %v357
    %v390 = vpack.c.b16 %v358, %v358
    %v391 = vpack.c.b16 %v359, %v359
    %v392 = vpack.c.b16 %v360, %v360
    %v393 = vpack.c.b16 %v361, %v361
    %v394 = vpack.c.b16 %v362, %v362
    %v395 = vpack.c.b16 %v363, %v363
    %v396 = vpack.c.b16 %v364, %v364
    %v397 = vpack.c.b16 %v365, %v365
    %v398 = vpack.c.b16 %v366, %v366
    %v399 = vpack.c.b16 %v367, %v367
    %v400 = vpack.c.b16 %v368, %v368
    %v401 = vpack.c.b16 %v369, %v369
    %v402 = vpack.c.b16 %v370, %v370
    %v403 = vpack.c.b16 %v371, %v371
    %v404 = vpack.c.b16 %v372, %v372
    %v405 = vpack.c.b16 %v373, %v373
    %v406 = vpack.c.b16 %v374, %v374
    %v407 = vpack.c.b16 %v375, %v375
    %v408 = vpack.c.b16 %v376, %v376
    %v409 = vpack.c.b16 %v377, %v377
    %v410 = vpack.c.b16 %v378, %v378
    %v411 = vpack.c.b16 %v379, %v379
    %v412 = vpack.c.b16 %v380, %v380
    %v413 = vpack.c.b16 %v381, %v381
    %v414 = vpack.c.b16 %v382, %v382
    %447 = vst [vmem:[#allocation2] sm:$0xf] %v383
    %448 = vst [vmem:[#allocation2 + $0x4] sm:$0xf] %v384
    %449 = vst [vmem:[#allocation2 + $0x8] sm:$0xf] %v385
    %450 = vst [vmem:[#allocation2 + $0xc] sm:$0xf] %v386
    %451 = vst [vmem:[#allocation2 + $0x10] sm:$0xf] %v387
    %452 = vst [vmem:[#allocation2 + $0x14] sm:$0xf] %v388
    %453 = vst [vmem:[#allocation2 + $0x18] sm:$0xf] %v389
    %454 = vst [vmem:[#allocation2 + $0x1c] sm:$0xf] %v390
    %455 = vst [vmem:[#allocation2 + $0x20] sm:$0xf] %v391
    %456 = vst [vmem:[#allocation2 + $0x24] sm:$0xf] %v392
    %457 = vst [vmem:[#allocation2 + $0x28] sm:$0xf] %v393
    %458 = vst [vmem:[#allocation2 + $0x2c] sm:$0xf] %v394
    %459 = vst [vmem:[#allocation2 + $0x30] sm:$0xf] %v395
    %460 = vst [vmem:[#allocation2 + $0x34] sm:$0xf] %v396
    %461 = vst [vmem:[#allocation2 + $0x38] sm:$0xf] %v397
    %462 = vst [vmem:[#allocation2 + $0x3c] sm:$0xf] %v398
    %463 = vst [vmem:[#allocation2 + $0x40] sm:$0xf] %v399
    %464 = vst [vmem:[#allocation2 + $0x44] sm:$0xf] %v400
    %465 = vst [vmem:[#allocation2 + $0x48] sm:$0xf] %v401
    %466 = vst [vmem:[#allocation2 + $0x4c] sm:$0xf] %v402
    %467 = vst [vmem:[#allocation2 + $0x50] sm:$0xf] %v403
    %468 = vst [vmem:[#allocation2 + $0x54] sm:$0xf] %v404
    %469 = vst [vmem:[#allocation2 + $0x58] sm:$0xf] %v405
    %470 = vst [vmem:[#allocation2 + $0x5c] sm:$0xf] %v406
    %471 = vst [vmem:[#allocation2 + $0x60] sm:$0xf] %v407
    %472 = vst [vmem:[#allocation2 + $0x64] sm:$0xf] %v408
    %473 = vst [vmem:[#allocation2 + $0x68] sm:$0xf] %v409
    %474 = vst [vmem:[#allocation2 + $0x6c] sm:$0xf] %v410
    %475 = vst [vmem:[#allocation2 + $0x70] sm:$0xf] %v411
    %476 = vst [vmem:[#allocation2 + $0x74] sm:$0xf] %v412
    %477 = vst [vmem:[#allocation2 + $0x78] sm:$0xf] %v413
    %478 = vst [vmem:[#allocation2 + $0x7c] sm:$0xf] %v414
    // Predicated region
    $region10: #{qwen2_vision_patch_embed.1} parent=1 // pred_check
      _
    $region11: #{qwen2_vision_patch_embed.1} parent=1 // pred_check_branch
      %480 = sbr.rel (0) target = $region13
    $region12: #{qwen2_vision_patch_embed.1} parent=1 // pred_region
      %s482 = ssub.s32 2048, 1600
      %483 = vsyncadd [#allocation3], %s482
      %s484 = sshll.u32 [#allocation2], 4
      %s485 = int_to_ptr.vmem [resolvable:$true] %s484
      %490 = dma.vmem_to_hbm [thread:$0]  %s485, 1600, %s2, [#allocation3], 64, 64, 4
    $region13: #{qwen2_vision_patch_embed.1} parent=1 // pred_fallthru
      _
    // Predicated region
    $region14: #{qwen2_vision_patch_embed.1} parent=1 // pred_check
      _
    $region15: #{qwen2_vision_patch_embed.1} parent=1 // pred_check_branch
      %492 = sbr.rel (0) target = $region17
    $region16: #{qwen2_vision_patch_embed.1} parent=1 // pred_region
      %493 = dma.done [#allocation3], 2048
    $region17: #{qwen2_vision_patch_embed.1} parent=1 // pred_fallthru
      _
    %494 = vsyncpa [#allocation3], 1

</llo_original>
